<compile_context>
chip_gen: v5e
topology: v5e:2x2
jax: 0.10.0
libtpu: 0.0.40
codegen_flags: <defaults>
</compile_context>

<pallas_src>
import functools
import math

import jax
import jax.numpy as jnp
from jax import lax
from jax.experimental import pallas as pl
from jax.experimental.pallas import tpu as pltpu


def _round_up(x, m):
    return ((x + m - 1) // m) * m


def _pos_encoding_kernel(c_ref, out_ref):
    """One (TM, W) lane-dense tile of the sinusoidal table.

    c_ref  : (2, W) f32 constant, resident across grid steps.
             c[0, l] = fold * div_term(l % D)
             c[1, l] = (l // D) * div_term(l % D) + phase(l % D)
    out_ref: (TM, W) f32.  Element (r, l) = sin((i*TM + r) * c0[l] + c1[l]).

    Exactly one transcendental (sin) plus one mul and one add per element;
    no exp, no cos, no parity select in the inner path.  Angles stay in f32.
    """
    i = pl.program_id(0)
    tm, w = out_ref.shape
    row = (lax.broadcasted_iota(jnp.int32, (tm, w), 0) + i * tm).astype(jnp.float32)
    c = c_ref[...]
    out_ref[...] = jnp.sin(row * c[0:1, :] + c[1:2, :])


def positional_encoding(x, max_len, *, tile_rows=512):
    """Pallas equivalent of PositionalEncoding(embed_size, max_len).forward(x).

    x: (B, S, D) -- only its shape is used (the module ignores x's values).
    Returns the (1, S, D) float32 positional-encoding slice pe[:, :S].
    """
    _, S, D = x.shape
    assert S <= max_len, "seq_len must not exceed max_len"
    assert D % 2 == 0, "embed_size must be even (matches the torch module)"

    # Lane-fold: if D < 128 and divides 128, pack 128//D consecutive positions
    # along the 128-lane axis so stores are full-width unmasked vst.
    fold = 1
    if D < 128 and 128 % D == 0 and S % (128 // D) == 0:
        fold = 128 // D
    W = fold * D          # lane width of the generated table
    P = S // fold         # rows of the generated (folded) table

    # Per-lane constants: computed once outside the kernel, DMA'd once (~KiB),
    # resident in VMEM for the whole grid.
    lane = jnp.arange(W, dtype=jnp.int32)
    feat = lane % D
    div_full = jnp.exp(
        -(2.0 * (feat // 2).astype(jnp.float32)) * (math.log(10000.0) / D))
    phase = jnp.where(feat % 2 == 1,
                      jnp.float32(math.pi / 2), jnp.float32(0.0))
    off = (lane // D).astype(jnp.float32)
    const = jnp.stack([fold * div_full, off * div_full + phase], axis=0)  # (2, W)

    # Row tile: sublane-aligned; >=2 grid steps when possible (v7x megacore);
    # <= ~8 MiB per output buffer so 2x-buffering fits every VMEM budget.
    vmem_cap_rows = max(8, ((8 << 20) // (4 * W)) // 8 * 8)
    if P <= 8:
        tm = P                                           # full-dim block
    else:
        tm = min(tile_rows, _round_up(pl.cdiv(P, 2), 8), vmem_cap_rows)
    grid = (pl.cdiv(P, tm),)

    pe = pl.pallas_call(
        _pos_encoding_kernel,
        out_shape=jax.ShapeDtypeStruct((P, W), jnp.float32),
        grid_spec=pltpu.PrefetchScalarGridSpec(
            num_scalar_prefetch=0,
            grid=grid,
            in_specs=[pl.BlockSpec((2, W), lambda i: (0, 0))],
            out_specs=pl.BlockSpec((tm, W), lambda i: (i, 0)),
        ),
        compiler_params=pltpu.CompilerParams(
            dimension_semantics=("parallel",)),
    )(const)

    # Contiguous un-fold back to (S, D): free reshape, no post-call slice.
    return pe.reshape(S, D)[None, :, :]


def _reference_pe(seq_len, embed_size, max_len):
    """Pure-JAX mirror of the torch buffer construction + forward slice."""
    position = jnp.arange(max_len, dtype=jnp.float32)[:, None]
    div_term = jnp.exp(
        jnp.arange(0, embed_size, 2, dtype=jnp.float32)
        * -(math.log(10000.0) / embed_size))
    pe = jnp.zeros((max_len, embed_size), dtype=jnp.float32)
    pe = pe.at[:, 0::2].set(jnp.sin(position * div_term))
    pe = pe.at[:, 1::2].set(jnp.cos(position * div_term))
    return pe[None, :seq_len, :]


if __name__ == "__main__":
    # Small shapes consistent with the module: x is (batch, seq_len, embed_size).
    batch, seq_len, embed_size, max_len = 2, 8, 32, 16

    key = jax.random.PRNGKey(0)
    x = jax.random.normal(key, (batch, seq_len, embed_size), dtype=jnp.float32)

    out = positional_encoding(x, max_len)
    out = jax.block_until_ready(out)

    ref = _reference_pe(seq_len, embed_size, max_len)
    assert out.shape == (1, seq_len, embed_size), out.shape
    assert jnp.allclose(out, ref, rtol=1e-4, atol=1e-4), (out, ref)

    print("KERNEL_OK")
</pallas_src>

<mosaic_0001>
module attributes {stable_mosaic.version = 11 : i64} {
  func.func @_pos_encoding_kernel(%arg0: i32, %arg1: memref<2x128xf32, #tpu.memory_space<vmem>>, %arg2: memref<2x128xf32, #tpu.memory_space<vmem>>) attributes {dimension_semantics = [#tpu.dimension_semantics<parallel>], iteration_bounds = array<i64: 1>, scalar_prefetch = 0 : i64, scratch_operands = 0 : i64, tpu.core_type = #tpu.core_type<tc>, window_params = [{pipeline_mode = #tpu.pipeline_mode<synchronous>, transform_indices = @transform_0, window_bounds = array<i64: 2, 128>}, {transform_indices = @transform_1, window_bounds = array<i64: 2, 128>}]} {
    %0 = tpu.iota {dimensions = array<i32: 0>} : vector<2x128xi32>
    %c2_i32 = arith.constant 2 : i32
    %1 = arith.muli %arg0, %c2_i32 : i32
    %2 = vector.broadcast %1 : i32 to vector<2x128xi32>
    %3 = arith.addi %0, %2 : vector<2x128xi32>
    %4 = arith.sitofp %3 : vector<2x128xi32> to vector<2x128xf32>
    %c0 = arith.constant 0 : index
    %c0_0 = arith.constant 0 : index
    %5 = vector.load %arg1[%c0, %c0_0] : memref<2x128xf32, #tpu.memory_space<vmem>>, vector<2x128xf32>
    %6 = vector.extract_strided_slice %5 {offsets = [0, 0], sizes = [1, 128], strides = [1, 1]} : vector<2x128xf32> to vector<1x128xf32>
    %7 = vector.broadcast %6 : vector<1x128xf32> to vector<2x128xf32>
    %8 = arith.mulf %4, %7 : vector<2x128xf32>
    %9 = vector.extract_strided_slice %5 {offsets = [1, 0], sizes = [1, 128], strides = [1, 1]} : vector<2x128xf32> to vector<1x128xf32>
    %10 = vector.broadcast %9 : vector<1x128xf32> to vector<2x128xf32>
    %11 = arith.addf %8, %10 : vector<2x128xf32>
    %12 = math.sin %11 : vector<2x128xf32>
    %c0_1 = arith.constant 0 : index
    %c0_2 = arith.constant 0 : index
    %13 = vector.load %arg2[%c0_1, %c0_2] : memref<2x128xf32, #tpu.memory_space<vmem>>, vector<2x128xf32>
    tpu.vector_store %arg2[%c0_1, %c0_2], %12 {strides = array<i32>} : memref<2x128xf32, #tpu.memory_space<vmem>>, vector<2x128xf32>,
    return
  }
  func.func @transform_0(%arg0: i32) -> (i32, i32) {
    %c0_i32 = arith.constant 0 : i32
    %c0_i32_0 = arith.constant 0 : i32
    %c0_i32_1 = arith.constant 0 : i32
    return %c0_i32, %c0_i32_0 : i32, i32
  }
  func.func @transform_1(%arg0: i32) -> (i32, i32) {
    %c0_i32 = arith.constant 0 : i32
    %c0_i32_0 = arith.constant 0 : i32
    return %arg0, %c0_i32 : i32, i32
  }
}

</mosaic_0001>

<llo_original>
// kernel: tpu_custom_call.1
$region0: #{tpu_custom_call.1}
  #allocation0 [shape = 'u32[]', space=smem, size = 0x4, offset = 0x4, fixed_abs, tag = 'smem constant byte address 0x4 - core index']
  #allocation1 [shape = 'u32[72,128]{1,0:T(1,128)}', space=vmem, size = 0x9000, scoped, tag = 'internal scratch']
  %s0 = inlined_call_operand.hbm [shape: f32[2,128], index: 0, kind: input, shape index: {}]
  %s1 = inlined_call_operand.hbm [shape: f32[2,128], index: 1, kind: output, shape index: {}]
  %s2 = sld [smem:[#allocation0]]
  $region18: #{tpu_custom_call.1} parent=0
    _
  %s4 = ssub.s32 1, %s2
  %s5 = scalar_select 0, %s4, %s2
  $region1: #{tpu_custom_call.1} parent=0
    #allocation2 [shape = 'u8[1024]{0}', space=vmem, size = 0x400, scoped, tag = 'input window, operand 0, single buffered']
    #allocation3 [shape = 's32[1]{0}', space=sflag, size = 0x4, scoped, tag = 'scoped memory for tpu_custom_call.1']
    #allocation4 [shape = 's32[1]{0}', space=sflag, size = 0x4, scoped, tag = 'scoped memory for tpu_custom_call.1']
    #allocation5 [shape = 'u8[1024]{0}', space=vmem, size = 0x400, scoped, tag = 'output window, operand 0, single buffered']
    %6 = vsyncpa [#allocation3], 0
    %7 = vsyncpa [#allocation4], 0
    // Predicated region
    $region2: #{tpu_custom_call.1} parent=1 // pred_check
      _
    $region3: #{tpu_custom_call.1} parent=1 // pred_check_branch
      %9 = sbr.rel (0) target = $region5
    $region4: #{tpu_custom_call.1} parent=1 // pred_region
      %11 = vsyncadd [#allocation3], 0
      %s13 = sshll.u32 %s0, 4
      %s14 = int_to_ptr.hbm [resolvable:$true] %s13
      %s15 = sshll.u32 [#allocation2], 4
      %s16 = int_to_ptr.vmem [resolvable:$true] %s15
      %18 = dma.hbm_to_vmem [thread:$0]  %s14, 32, %s16, [#allocation3]
    $region5: #{tpu_custom_call.1} parent=1 // pred_fallthru
      _
    // Predicated region
    $region6: #{tpu_custom_call.1} parent=1 // pred_check
      _
    $region7: #{tpu_custom_call.1} parent=1 // pred_check_branch
      %20 = sbr.rel (0) target = $region9
    $region8: #{tpu_custom_call.1} parent=1 // pred_region
      %22 = dma.done [#allocation3], 32
    $region9: #{tpu_custom_call.1} parent=1 // pred_fallthru
      _
    %v23 = vlaneseq
    %v24 = vshrl.u32 %v23, 7
    %s25 = smul.u32 0, 2
    %v26 = vstv %s25
    %v27 = vadd.s32 %v24, %v26
    %v28 = vcvt.s32.f32 %v27
    %v29 = vld [vmem:[#allocation2] sm:$0x3]
    %v30 = vperm.slane %v29, 0
    %v31 = vmul.f32 %v28, %v30
    %v32 = vperm.slane %v29, 1
    %v33 = vadd.f32 %v31, %v32
    %v34 = vand.u32 2147483647, %v33
    %vm35 = vcmp.le.f32.partialorder %v34, 0.7853982
    %vm36 = vcmp.lt.s32.totalorder %v33, 0
    %v37 = vand.u32 %v33, 2139095040
    %v38 = vshrl.u32 %v37, 23
    %v39 = vsub.s32 %v38, 127
    %v40 = vand.u32 2147483647, %v33
    %v41 = vand.u32 %v40, 8388607
    %v42 = vor.u32 %v41, 8388608
    %v43 = vsub.s32 0, %v42
    %v44 = vadd.s32 %v39, 1
    %vm45 = vcmp.gt.s32.totalorder %v44, 0
    %v46 = vsel %vm45, %v44, 0
    %v47 = vshrl.u32 %v46, 5
    %v48 = vand.u32 %v46, 31
    %v49 = vsub.s32 32, %v48
    %v50 = vshrl.u32 683565275, %v49
    %v51 = vshll.u32 683565275, %v48
    %v52 = vshrl.u32 2475754826, %v49
    %v53 = vor.u32 %v51, %v52
    %v54 = vshll.u32 2475754826, %v48
    %v55 = vshrl.u32 2131351028, %v49
    %v56 = vor.u32 %v54, %v55
    %v57 = vshll.u32 2131351028, %v48
    %v58 = vshrl.u32 2102212464, %v49
    %v59 = vor.u32 %v57, %v58
    %v60 = vshll.u32 2102212464, %v48
    %v61 = vshrl.u32 920167782, %v49
    %v62 = vor.u32 %v60, %v61
    %v63 = vshll.u32 920167782, %v48
    %v64 = vshrl.u32 1326507024, %v49
    %v65 = vor.u32 %v63, %v64
    %vm66 = vcmp.lt.s32.totalorder %v47, 1
    %vm67 = vcmp.lt.s32.totalorder %v47, 2
    %vm68 = vcmp.lt.s32.totalorder %v47, 3
    %vm69 = vcmp.lt.s32.totalorder %v47, 4
    %v70 = vsel %vm66, %v50, %v53
    %v71 = vsel %vm69, %v59, 2102212464
    %v72 = vsel %vm68, %v56, %v71
    %v73 = vsel %vm67, %v70, %v72
    %v74 = vsel %vm66, %v53, %v56
    %v75 = vsel %vm69, %v62, 920167782
    %v76 = vsel %vm68, %v59, %v75
    %v77 = vsel %vm67, %v74, %v76
    %v78 = vsel %vm66, %v56, %v59
    %v79 = vsel %vm69, %v65, 1326507024
    %v80 = vsel %vm68, %v62, %v79
    %v81 = vsel %vm67, %v78, %v80
    %v82 = vshll.u32 %v42, 8
    %v83 = vand.u32 %v82, 65535
    %v84 = vshrl.u32 %v82, 16
    %v85 = vand.u32 %v81, 65535
    %v86 = vshrl.u32 %v81, 16
    %v87 = vmul.u32 %v83, %v85
    %v88 = vmul.u32 %v83, %v86
    %v89 = vmul.u32 %v84, %v85
    %v90 = vmul.u32 %v84, %v86
    %v91 = vshll.u32 %v88, 16
    %v92 = vshrl.u32 %v88, 16
    %v93 = vshll.u32 %v89, 16
    %v94 = vshrl.u32 %v89, 16
    %vm95 = vc.u32 %v87, %v91
    %v96 = vsel %vm95, 1, 0
    %v97 = vadd.s32 %v87, %v91
    %v98 = vadd.s32 %v90, %v96
    %vm99 = vc.u32 %v97, %v93
    %v100 = vsel %vm99, 1, 0
    %v101 = vadd.s32 %v97, %v93
    %v102 = vadd.s32 %v98, %v100
    %v103 = vadd.s32 %v102, %v92
    %v104 = vadd.s32 %v103, %v94
    %v105 = vand.u32 %v82, 65535
    %v106 = vshrl.u32 %v82, 16
    %v107 = vand.u32 %v77, 65535
    %v108 = vshrl.u32 %v77, 16
    %v109 = vmul.u32 %v105, %v107
    %v110 = vmul.u32 %v105, %v108
    %v111 = vmul.u32 %v106, %v107
    %v112 = vmul.u32 %v106, %v108
    %v113 = vshll.u32 %v110, 16
    %v114 = vshrl.u32 %v110, 16
    %v115 = vshll.u32 %v111, 16
    %v116 = vshrl.u32 %v111, 16
    %vm117 = vc.u32 %v109, %v113
    %v118 = vsel %vm117, 1, 0
    %v119 = vadd.s32 %v109, %v113
    %v120 = vadd.s32 %v112, %v118
    %vm121 = vc.u32 %v119, %v115
    %v122 = vsel %vm121, 1, 0
    %v123 = vadd.s32 %v119, %v115
    %v124 = vadd.s32 %v120, %v122
    %v125 = vadd.s32 %v124, %v114
    %v126 = vadd.s32 %v125, %v116
    %v127 = vmul.u32 %v82, %v73
    %v128 = vadd.s32 %v104, %v123
    %vm129 = vc.u32 %v104, %v123
    %v130 = vadd.s32 %v126, 1
    %v131 = vsel %vm129, %v130, %v126
    %v132 = vadd.s32 %v127, %v131
    %v133 = vadd.s32 %v132, 536870912
    %v134 = vshrl.u32 %v133, 30
    %v135 = vshll.u32 %v134, 30
    %v136 = vsub.s32 %v132, %v135
    %vm137 = vcmp.lt.s32.totalorder %v136, 0
    %v138 = vsub.s32 0, %v136
    %v139 = vsel %vm137, %v138, %v136
    %v140 = vclz %v139
    %v141 = vsub.s32 %v140, 2
    %vm142 = vcmp.gt.s32.totalorder 0, %v141
    %v143 = vsel %vm142, 0, %v141
    %v144 = vsub.s32 32, %v143
    %v145 = vshll.u32 %v136, %v143
    %v146 = vshrl.u32 %v128, %v144
    %v147 = vor.u32 %v145, %v146
    %v148 = vsub.s32 4294967266, %v143
    %v149 = vadd.s32 %v148, 127
    %v150 = vshll.u32 %v149, 23
    %v151 = vor.u32 4788187, %v150
    %v152 = vand.u32 2147483647, %v151
    %v154 = vcvt.s32.f32 %v147
    %v155 = vmul.f32 %v154, %v152
    %v156 = vxor.u32 %v155, 2147483648
    %v157 = vsel %vm36, %v156, %v155
    %v158 = vsub.s32 4, %v134
    %v159 = vsel %vm36, %v158, %v134
    %v160 = vsel %vm35, %v33, %v157
    %v161 = vsel %vm35, 0, %v159
    %v162 = vmul.f32 %v160, %v160
    %v163 = vmul.f32 %v162, -0.001358992
    %v164 = vadd.f32 %v163, 0.041655596
    %v165 = vmul.f32 %v162, %v164
    %v166 = vadd.f32 %v165, -0.4999988
    %v167 = vmul.f32 %v162, %v166
    %v168 = vadd.f32 1.0, %v167
    %v169 = vmul.f32 %v160, %v160
    %v170 = vmul.f32 %v169, -0.00019511016
    %v171 = vadd.f32 %v170, 0.008332121
    %v172 = vmul.f32 %v169, %v171
    %v173 = vadd.f32 %v172, -0.16666654
    %v174 = vmul.f32 %v169, %v173
    %v175 = vadd.f32 %v174, 1.0
    %v176 = vmul.f32 %v175, %v160
    %vm177 = vweird.f32 %v33
    %v178 = vadd.s32 %v161, 3
    %v179 = vand.u32 %v178, 3
    %vm180 = vcmp.lt.s32.totalorder %v179, 2
    %vm181 = vcmp.eq.s32.totalorder %v179, 0
    %v182 = vxor.u32 %v176, 2147483648
    %v183 = vsel %vm181, %v168, %v182
    %vm184 = vcmp.eq.s32.totalorder %v179, 2
    %v185 = vxor.u32 %v168, 2147483648
    %v186 = vsel %vm184, %v185, %v176
    %v187 = vsel %vm180, %v183, %v186
    %v188 = vsel %vm177, nan, %v187
    %189 = vst [vmem:[#allocation5] sm:$0x3] %v188
    // Predicated region
    $region10: #{tpu_custom_call.1} parent=1 // pred_check
      _
    $region11: #{tpu_custom_call.1} parent=1 // pred_check_branch
      %191 = sbr.rel (0) target = $region13
    $region12: #{tpu_custom_call.1} parent=1 // pred_region
      %193 = vsyncadd [#allocation4], 0
      %s195 = sshll.u32 [#allocation5], 4
      %s196 = int_to_ptr.vmem [resolvable:$true] %s195
      %s197 = sshll.u32 %s1, 4
      %s198 = int_to_ptr.hbm [resolvable:$true] %s197
      %200 = dma.vmem_to_hbm [thread:$0]  %s196, 32, %s198, [#allocation4]
    $region13: #{tpu_custom_call.1} parent=1 // pred_fallthru
      _
    // Predicated region
    $region14: #{tpu_custom_call.1} parent=1 // pred_check
      _
    $region15: #{tpu_custom_call.1} parent=1 // pred_check_branch
      %202 = sbr.rel (0) target = $region17
    $region16: #{tpu_custom_call.1} parent=1 // pred_region
      %204 = dma.done [#allocation4], 32
    $region17: #{tpu_custom_call.1} parent=1 // pred_fallthru
      _
    %205 = vsyncpa [#allocation3], 1
    %206 = vsyncpa [#allocation4], 1

</llo_original>
